<compile_context>
chip_gen: v6e
topology: v6e:2x2x1
jax: 0.10.0
libtpu: 0.0.40
codegen_flags: <defaults>
</compile_context>

<pallas_src>
import jax
import jax.numpy as jnp
from jax.experimental import pallas as pl
from jax.experimental.pallas import tpu as pltpu


def _leaky_relu(x, negative_slope=0.01):
    return jnp.where(x > 0, x, negative_slope * x)


def _make_critic_kernel(hidden_widths, compute_dtype):
    """Kernel closure over the (static) hidden-layer widths and matmul dtype."""
    num_hidden = len(hidden_widths)

    def kernel(state_ref, action_ref, *refs):
        # refs layout:
        #   [0]        : w1_state   (S, H1)
        #   [1]        : w1_action  (A, H1)
        #   [2..H]     : w_i        (H_{i-1}, H_i) for remaining hidden layers
        #   [-3]       : w_out_row  (1, H_last)              (f32)
        #   [-2]       : biases     (num_hidden+1, max_width) (f32)
        #   [-1]       : out        (1, 1, block_m)
        out_ref = refs[-1]
        biases_ref = refs[-2]
        w_out_ref = refs[-3]
        w_refs = refs[:-3]

        s = state_ref[...].astype(compute_dtype)
        a = action_ref[...].astype(compute_dtype)

        # First hidden layer: split matmul over the (state | action) concat
        # boundary -- mathematically identical to concat + single matmul.
        x = jnp.dot(s, w_refs[0][...], preferred_element_type=jnp.float32)
        x = x + jnp.dot(a, w_refs[1][...], preferred_element_type=jnp.float32)
        x = _leaky_relu(x + biases_ref[0:1, : hidden_widths[0]])

        # Remaining hidden layers (f32 bias/activation epilogue).
        for li in range(1, num_hidden):
            w = w_refs[li + 1][...]
            y = jnp.dot(x.astype(compute_dtype), w,
                        preferred_element_type=jnp.float32)
            x = _leaky_relu(y + biases_ref[li:li + 1, : hidden_widths[li]])

        # Output layer (H_last -> 1), emitted lane-dense: contract
        # w_out (1, H) against x (block_m, H) over H -> (1, block_m) row.
        q_row = jnp.einsum('oh,mh->om', w_out_ref[...], x,
                           preferred_element_type=jnp.float32)
        q_row = q_row + biases_ref[num_hidden:num_hidden + 1, 0:1]   # (1,1) bias
        out_ref[...] = q_row[None].astype(out_ref.dtype)             # (1,1,block_m)

    return kernel


def critic_forward(state, action, params, *, tm=1024, compute_dtype=jnp.float32):
    """Run the critic MLP inside a single batch-tiled Pallas kernel.

    params: list of (W, b) pairs with W of shape (in, out), b of shape (1, out).
            Last pair is the output layer (out == 1).
    tm:     batch tile size (rows per grid step); multiples of 128 recommended.
    compute_dtype: dtype of the hidden-layer matmul operands (f32 or bf16);
            accumulation / bias / activation stay in f32 either way.
    """
    batch, state_size = state.shape
    action_size = action.shape[1]

    hidden_params = params[:-1]
    w_out, b_out = params[-1]
    hidden_widths = [w.shape[1] for w, _ in hidden_params]
    num_hidden = len(hidden_widths)

    # Split the first-layer weight along the concat boundary.
    w1 = hidden_params[0][0]
    weight_inputs = [w1[:state_size], w1[state_size:]] + \
                    [w for w, _ in hidden_params[1:]]
    if compute_dtype != jnp.float32:
        weight_inputs = [w.astype(compute_dtype) for w in weight_inputs]

    w_out_row = w_out.reshape(1, -1).astype(jnp.float32)            # (1, H_last)

    # Stack all biases (hidden + output) into one small VMEM-resident table.
    max_w = max(hidden_widths + [1])
    biases = jnp.zeros((num_hidden + 1, max_w), dtype=jnp.float32)
    for i, (_, b) in enumerate(hidden_params):
        biases = biases.at[i, : b.shape[1]].set(b.reshape(-1))
    biases = biases.at[num_hidden, 0].set(b_out.reshape(()))

    # Batch tiling. No host-side padding: the ragged last block is handled by
    # Pallas' masked boundary reads; out-of-range rows are sliced off below.
    if batch > tm:
        block_m = tm
    elif batch >= 256:
        # Split into (at least) two 128-aligned blocks so a dual-TC chip
        # (v7x) can shard the "parallel" grid axis across both cores.
        block_m = 128 * pl.cdiv(pl.cdiv(batch, 2), 128)
    else:
        block_m = batch
    num_tiles = pl.cdiv(batch, block_m)
    grid = (num_tiles,)

    kernel = _make_critic_kernel(hidden_widths, compute_dtype)

    flat_inputs = [state, action] + weight_inputs + [w_out_row, biases]

    in_specs = [
        pl.BlockSpec((block_m, state_size), lambda i: (i, 0)),
        pl.BlockSpec((block_m, action_size), lambda i: (i, 0)),
    ]
    # Weights / biases: full-array blocks with constant index_maps -> resident
    # in VMEM across all grid steps.
    # TODO(synk): for realistic DDPG widths (e.g. 400/300), add
    # pipeline_mode=pl.Buffered(1) on these specs to drop the redundant second
    # buffer and pad widths to multiples of 128 at param-prep time.
    for arr in weight_inputs + [w_out_row, biases]:
        in_specs.append(pl.BlockSpec(arr.shape, lambda i: (0, 0)))
    out_spec = pl.BlockSpec((1, 1, block_m), lambda i: (i, 0, 0))

    # Rough scoped-VMEM need: double-buffered input/output tiles + resident
    # weights (x2 default buffering) + f32 activation headroom. v5e's default
    # scoped limit is only 16 MiB, so pass an explicit limit.
    def _nbytes(a):
        return int(a.size) * int(a.dtype.itemsize)

    itm = int(state.dtype.itemsize)
    vmem_est = (2 * block_m * (state_size + action_size) * itm
                + 2 * block_m * 4
                + 2 * sum(_nbytes(a) for a in weight_inputs + [w_out_row, biases])
                + 4 * block_m * max(hidden_widths) * 4)
    vmem_limit = int(min(max(2 * vmem_est, 32 * 1024 * 1024), 100 * 1024 * 1024))

    out = pl.pallas_call(
        kernel,
        out_shape=jax.ShapeDtypeStruct((num_tiles, 1, block_m), jnp.float32),
        grid=grid,
        in_specs=in_specs,
        out_specs=out_spec,
        compiler_params=pltpu.CompilerParams(
            dimension_semantics=("parallel",),
            vmem_limit_bytes=vmem_limit),
    )(*flat_inputs)

    # (num_tiles, 1, block_m) -> (batch, 1); drops any ragged-tile garbage.
    return out.reshape(-1)[:batch].reshape(batch, 1)


def init_critic_params(key, state_size, action_size, hidden_layers):
    """Deterministic init mirroring the PyTorch module:
       xavier_normal weights + zero bias for hidden layers,
       uniform(-0.003, 0.003) weights (bias zero) for the output layer."""
    sizes = [state_size + action_size] + list(hidden_layers)
    params = []
    for i in range(len(hidden_layers)):
        fan_in, fan_out = sizes[i], sizes[i + 1]
        key, sub = jax.random.split(key)
        std = (2.0 / (fan_in + fan_out)) ** 0.5  # xavier normal
        w = std * jax.random.normal(sub, (fan_in, fan_out), dtype=jnp.float32)
        b = jnp.zeros((1, fan_out), dtype=jnp.float32)
        params.append((w, b))
    key, sub = jax.random.split(key)
    w_out = jax.random.uniform(
        sub, (hidden_layers[-1], 1), minval=-0.003, maxval=0.003,
        dtype=jnp.float32)
    b_out = jnp.zeros((1, 1), dtype=jnp.float32)
    params.append((w_out, b_out))
    return params


def critic_reference(state, action, params):
    """Pure-JAX reference for correctness check."""
    x = jnp.concatenate([state, action], axis=1)
    for w, b in params[:-1]:
        x = _leaky_relu(x @ w + b)
    w_out, b_out = params[-1]
    return x @ w_out + b_out


if __name__ == "__main__":
    batch, state_size, action_size = 2, 8, 4
    hidden_layers = [32, 32]

    key = jax.random.PRNGKey(0)
    k_state, k_action, k_params = jax.random.split(key, 3)

    state = jax.random.normal(k_state, (batch, state_size), dtype=jnp.float32)
    action = jax.random.normal(k_action, (batch, action_size), dtype=jnp.float32)
    params = init_critic_params(k_params, state_size, action_size, hidden_layers)

    # Small-batch path (single block, grid of 1).
    q = jax.block_until_ready(critic_forward(state, action, params))
    q_ref = critic_reference(state, action, params)
    assert q.shape == (batch, 1), q.shape
    assert jnp.allclose(q, q_ref, atol=1e-5, rtol=1e-5), (q, q_ref)

    # Medium batch, default tm: split into two 128-aligned tiles (dual-TC path)
    # with a ragged last block (no host padding).
    big_batch = 300
    k_s2, k_a2 = jax.random.split(jax.random.PRNGKey(1))
    state2 = jax.random.normal(k_s2, (big_batch, state_size), dtype=jnp.float32)
    action2 = jax.random.normal(k_a2, (big_batch, action_size), dtype=jnp.float32)
    q2 = jax.block_until_ready(critic_forward(state2, action2, params))
    q2_ref = critic_reference(state2, action2, params)
    assert q2.shape == (big_batch, 1), q2.shape
    assert jnp.allclose(q2, q2_ref, atol=1e-5, rtol=1e-4), (q2, q2_ref)

    # Explicit small tile: grid of 3 with a ragged last block.
    q3 = jax.block_until_ready(critic_forward(state2, action2, params, tm=128))
    assert q3.shape == (big_batch, 1), q3.shape
    assert jnp.allclose(q3, q2_ref, atol=1e-5, rtol=1e-4), (q3, q2_ref)

    print("KERNEL_OK")
</pallas_src>

<mosaic_0001>
module attributes {stable_mosaic.version = 11 : i64} {
  func.func @kernel(%arg0: i32, %arg1: memref<2x8xf32, #tpu.memory_space<vmem>>, %arg2: memref<2x4xf32, #tpu.memory_space<vmem>>, %arg3: memref<8x32xf32, #tpu.memory_space<vmem>>, %arg4: memref<4x32xf32, #tpu.memory_space<vmem>>, %arg5: memref<32x32xf32, #tpu.memory_space<vmem>>, %arg6: memref<1x32xf32, #tpu.memory_space<vmem>>, %arg7: memref<3x32xf32, #tpu.memory_space<vmem>>, %arg8: memref<1x1x2xf32, #tpu.memory_space<vmem>>) attributes {dimension_semantics = [#tpu.dimension_semantics<parallel>], iteration_bounds = array<i64: 1>, scalar_prefetch = 0 : i64, scratch_operands = 0 : i64, tpu.core_type = #tpu.core_type<tc>, window_params = [{transform_indices = @transform_0, window_bounds = array<i64: 2, 8>}, {transform_indices = @transform_1, window_bounds = array<i64: 2, 4>}, {pipeline_mode = #tpu.pipeline_mode<synchronous>, transform_indices = @transform_2, window_bounds = array<i64: 8, 32>}, {pipeline_mode = #tpu.pipeline_mode<synchronous>, transform_indices = @transform_3, window_bounds = array<i64: 4, 32>}, {pipeline_mode = #tpu.pipeline_mode<synchronous>, transform_indices = @transform_4, window_bounds = array<i64: 32, 32>}, {pipeline_mode = #tpu.pipeline_mode<synchronous>, transform_indices = @transform_5, window_bounds = array<i64: 1, 32>}, {pipeline_mode = #tpu.pipeline_mode<synchronous>, transform_indices = @transform_6, window_bounds = array<i64: 3, 32>}, {transform_indices = @transform_7, window_bounds = array<i64: 1, 1, 2>}]} {
    %c0 = arith.constant 0 : index
    %c0_0 = arith.constant 0 : index
    %0 = vector.load %arg1[%c0, %c0_0] : memref<2x8xf32, #tpu.memory_space<vmem>>, vector<2x8xf32>
    %c0_1 = arith.constant 0 : index
    %c0_2 = arith.constant 0 : index
    %1 = vector.load %arg2[%c0_1, %c0_2] : memref<2x4xf32, #tpu.memory_space<vmem>>, vector<2x4xf32>
    %c0_3 = arith.constant 0 : index
    %c0_4 = arith.constant 0 : index
    %2 = vector.load %arg3[%c0_3, %c0_4] : memref<8x32xf32, #tpu.memory_space<vmem>>, vector<8x32xf32>
    %cst = arith.constant dense<0.000000e+00> : vector<2x32xf32>
    %3 = tpu.matmul %0, %2, %cst {dimension_numbers = #tpu.dot_dimension_numbers<[1], [0], [0], [1], [0, 0, 1, 1], [], []>} : vector<2x8xf32>, vector<8x32xf32>, vector<2x32xf32> -> vector<2x32xf32>
    %c0_5 = arith.constant 0 : index
    %c0_6 = arith.constant 0 : index
    %4 = vector.load %arg4[%c0_5, %c0_6] : memref<4x32xf32, #tpu.memory_space<vmem>>, vector<4x32xf32>
    %cst_7 = arith.constant dense<0.000000e+00> : vector<2x32xf32>
    %5 = tpu.matmul %1, %4, %cst_7 {dimension_numbers = #tpu.dot_dimension_numbers<[1], [0], [0], [1], [0, 0, 1, 1], [], []>} : vector<2x4xf32>, vector<4x32xf32>, vector<2x32xf32> -> vector<2x32xf32>
    %6 = arith.addf %3, %5 : vector<2x32xf32>
    %c0_8 = arith.constant 0 : index
    %c0_9 = arith.constant 0 : index
    %7 = vector.load %arg7[%c0_8, %c0_9] : memref<3x32xf32, #tpu.memory_space<vmem>>, vector<1x32xf32>
    %8 = vector.broadcast %7 : vector<1x32xf32> to vector<2x32xf32>
    %9 = arith.addf %6, %8 : vector<2x32xf32>
    %cst_10 = arith.constant 0.000000e+00 : f32
    %10 = vector.broadcast %cst_10 : f32 to vector<2x32xf32>
    %11 = arith.cmpf ogt, %9, %10 : vector<2x32xf32>
    %cst_11 = arith.constant 0.00999999977 : f32
    %12 = vector.broadcast %cst_11 : f32 to vector<2x32xf32>
    %13 = arith.mulf %12, %9 : vector<2x32xf32>
    %14 = arith.select %11, %9, %13 : vector<2x32xi1>, vector<2x32xf32>
    %c0_12 = arith.constant 0 : index
    %c0_13 = arith.constant 0 : index
    %15 = vector.load %arg5[%c0_12, %c0_13] : memref<32x32xf32, #tpu.memory_space<vmem>>, vector<32x32xf32>
    %cst_14 = arith.constant dense<0.000000e+00> : vector<2x32xf32>
    %16 = tpu.matmul %14, %15, %cst_14 {dimension_numbers = #tpu.dot_dimension_numbers<[1], [0], [0], [1], [0, 0, 1, 1], [], []>} : vector<2x32xf32>, vector<32x32xf32>, vector<2x32xf32> -> vector<2x32xf32>
    %c1 = arith.constant 1 : index
    %c0_15 = arith.constant 0 : index
    %17 = vector.load %arg7[%c1, %c0_15] : memref<3x32xf32, #tpu.memory_space<vmem>>, vector<1x32xf32>
    %18 = vector.broadcast %17 : vector<1x32xf32> to vector<2x32xf32>
    %19 = arith.addf %16, %18 : vector<2x32xf32>
    %cst_16 = arith.constant 0.000000e+00 : f32
    %20 = vector.broadcast %cst_16 : f32 to vector<2x32xf32>
    %21 = arith.cmpf ogt, %19, %20 : vector<2x32xf32>
    %cst_17 = arith.constant 0.00999999977 : f32
    %22 = vector.broadcast %cst_17 : f32 to vector<2x32xf32>
    %23 = arith.mulf %22, %19 : vector<2x32xf32>
    %24 = arith.select %21, %19, %23 : vector<2x32xi1>, vector<2x32xf32>
    %c0_18 = arith.constant 0 : index
    %c0_19 = arith.constant 0 : index
    %25 = vector.load %arg6[%c0_18, %c0_19] : memref<1x32xf32, #tpu.memory_space<vmem>>, vector<1x32xf32>
    "tpu.trace_start"() <{level = 10 : i32, message = "oh,mh->om"}> : () -> ()
    %cst_20 = arith.constant dense<0.000000e+00> : vector<1x2xf32>
    %26 = tpu.matmul %25, %24, %cst_20 {dimension_numbers = #tpu.dot_dimension_numbers<[1], [1], [0], [0], [0, 0, 1, 0], [], []>} : vector<1x32xf32>, vector<2x32xf32>, vector<1x2xf32> -> vector<1x2xf32>
    "tpu.trace_stop"() : () -> ()
    %c2 = arith.constant 2 : index
    %c0_21 = arith.constant 0 : index
    %27 = vector.load %arg7[%c2, %c0_21] : memref<3x32xf32, #tpu.memory_space<vmem>>, vector<1x1xf32>
    %28 = vector.broadcast %27 : vector<1x1xf32> to vector<1x2xf32>
    %29 = arith.addf %26, %28 : vector<1x2xf32>
    %30 = vector.shape_cast %29 : vector<1x2xf32> to vector<1x1x2xf32>
    %c0_22 = arith.constant 0 : index
    %c0_23 = arith.constant 0 : index
    %c0_24 = arith.constant 0 : index
    %31 = vector.load %arg8[%c0_22, %c0_23, %c0_24] : memref<1x1x2xf32, #tpu.memory_space<vmem>>, vector<1x1x2xf32>
    tpu.vector_store %arg8[%c0_22, %c0_23, %c0_24], %30 {strides = array<i32>} : memref<1x1x2xf32, #tpu.memory_space<vmem>>, vector<1x1x2xf32>,
    return
  }
  func.func @transform_0(%arg0: i32) -> (i32, i32) {
    %c0_i32 = arith.constant 0 : i32
    %c0_i32_0 = arith.constant 0 : i32
    return %arg0, %c0_i32 : i32, i32
  }
  func.func @transform_1(%arg0: i32) -> (i32, i32) {
    %c0_i32 = arith.constant 0 : i32
    %c0_i32_0 = arith.constant 0 : i32
    return %arg0, %c0_i32 : i32, i32
  }
  func.func @transform_2(%arg0: i32) -> (i32, i32) {
    %c0_i32 = arith.constant 0 : i32
    %c0_i32_0 = arith.constant 0 : i32
    %c0_i32_1 = arith.constant 0 : i32
    return %c0_i32, %c0_i32_0 : i32, i32
  }
  func.func @transform_3(%arg0: i32) -> (i32, i32) {
    %c0_i32 = arith.constant 0 : i32
    %c0_i32_0 = arith.constant 0 : i32
    %c0_i32_1 = arith.constant 0 : i32
    return %c0_i32, %c0_i32_0 : i32, i32
  }
  func.func @transform_4(%arg0: i32) -> (i32, i32) {
    %c0_i32 = arith.constant 0 : i32
    %c0_i32_0 = arith.constant 0 : i32
    %c0_i32_1 = arith.constant 0 : i32
    return %c0_i32, %c0_i32_0 : i32, i32
  }
  func.func @transform_5(%arg0: i32) -> (i32, i32) {
    %c0_i32 = arith.constant 0 : i32
    %c0_i32_0 = arith.constant 0 : i32
    %c0_i32_1 = arith.constant 0 : i32
    return %c0_i32, %c0_i32_0 : i32, i32
  }
  func.func @transform_6(%arg0: i32) -> (i32, i32) {
    %c0_i32 = arith.constant 0 : i32
    %c0_i32_0 = arith.constant 0 : i32
    %c0_i32_1 = arith.constant 0 : i32
    return %c0_i32, %c0_i32_0 : i32, i32
  }
  func.func @transform_7(%arg0: i32) -> (i32, i32, i32) {
    %c0_i32 = arith.constant 0 : i32
    %c0_i32_0 = arith.constant 0 : i32
    %c0_i32_1 = arith.constant 0 : i32
    return %arg0, %c0_i32, %c0_i32_0 : i32, i32, i32
  }
}

</mosaic_0001>

<llo_original>
// kernel: tpu_custom_call.1
$region0: #{tpu_custom_call.1}
  #allocation0 [shape = 'u32[]', space=smem, size = 0x4, offset = 0x4, fixed_abs, tag = 'smem constant byte address 0x4 - core index']
  #allocation1 [shape = 'u32[144,128]{1,0:T(1,128)}', space=vmem, size = 0x12000, scoped, tag = 'internal scratch']
  %s0 = inlined_call_operand.hbm [shape: f32[2,8], index: 0, kind: input, shape index: {}]
  %s1 = inlined_call_operand.hbm [shape: f32[2,4], index: 1, kind: input, shape index: {}]
  %s2 = inlined_call_operand.hbm [shape: f32[8,32], index: 2, kind: input, shape index: {}]
  %s3 = inlined_call_operand.vmem [shape: f32[4,32], index: 3, kind: input, shape index: {}]
  %s4 = inlined_call_operand.hbm [shape: f32[32,32], index: 4, kind: input, shape index: {}]
  %s5 = inlined_call_operand.vmem [shape: f32[1,32], index: 5, kind: input, shape index: {}]
  %s6 = inlined_call_operand.vmem [shape: f32[3,32], index: 6, kind: input, shape index: {}]
  %s7 = inlined_call_operand.hbm [shape: f32[1,1,2], index: 7, kind: output, shape index: {}]
  %s8 = sld [smem:[#allocation0]]
  $region54: #{tpu_custom_call.1} parent=0
    _
  %s10 = ssub.s32 1, %s8
  %s11 = scalar_select 0, %s10, %s8
  $region1: #{tpu_custom_call.1} parent=0
    #allocation2 [shape = 'u8[1024]{0}', space=vmem, size = 0x400, scoped, tag = 'input window, operand 0, single buffered']
    #allocation3 [shape = 's32[1]{0}', space=sflag, size = 0x4, scoped, tag = 'scoped memory for tpu_custom_call.1']
    #allocation4 [shape = 's32[1]{0}', space=sflag, size = 0x4, scoped, tag = 'scoped memory for tpu_custom_call.1']
    #allocation5 [shape = 'u8[1024]{0}', space=vmem, size = 0x400, scoped, tag = 'input window, operand 1, single buffered']
    #allocation6 [shape = 's32[1]{0}', space=sflag, size = 0x4, scoped, tag = 'scoped memory for tpu_custom_call.1']
    #allocation7 [shape = 'u8[4096]{0}', space=vmem, size = 0x1000, scoped, tag = 'input window, operand 2, single buffered']
    #allocation8 [shape = 'u8[16384]{0}', space=vmem, size = 0x4000, scoped, tag = 'input window, operand 4, single buffered']
    #allocation9 [shape = 's32[1]{0}', space=sflag, size = 0x4, scoped, tag = 'scoped memory for tpu_custom_call.1']
    #allocation10 [shape = 'u8[512]{0}', space=vmem, size = 0x400, scoped, tag = 'output window, operand 0, single buffered']
    %12 = vsyncpa [#allocation3], 0
    %13 = vsyncpa [#allocation6], 0
    %14 = vsyncpa [#allocation9], 0
    %15 = vsyncpa [#allocation4], 0
    // Predicated region
    $region2: #{tpu_custom_call.1} parent=1 // pred_check
      _
    $region3: #{tpu_custom_call.1} parent=1 // pred_check_branch
      %17 = sbr.rel (0) target = $region5
    $region4: #{tpu_custom_call.1} parent=1 // pred_region
      %s19 = ssub.s32 32, 32
      %20 = vsyncadd [#allocation3], %s19
      %s22 = sshll.u32 [#allocation2], 4
      %s23 = int_to_ptr.vmem [resolvable:$true] %s22
      %25 = dma.hbm_to_vmem [thread:$0]  %s0, 32, %s23, [#allocation3]
    $region5: #{tpu_custom_call.1} parent=1 // pred_fallthru
      _
    // Predicated region
    $region6: #{tpu_custom_call.1} parent=1 // pred_check
      _
    $region7: #{tpu_custom_call.1} parent=1 // pred_check_branch
      %27 = sbr.rel (0) target = $region9
    $region8: #{tpu_custom_call.1} parent=1 // pred_region
      %s29 = ssub.s32 32, 32
      %30 = vsyncadd [#allocation6], %s29
      %s32 = sshll.u32 [#allocation5], 4
      %s33 = int_to_ptr.vmem [resolvable:$true] %s32
      %35 = dma.hbm_to_vmem [thread:$0]  %s1, 32, %s33, [#allocation6]
    $region9: #{tpu_custom_call.1} parent=1 // pred_fallthru
      _
    // Predicated region
    $region10: #{tpu_custom_call.1} parent=1 // pred_check
      _
    $region11: #{tpu_custom_call.1} parent=1 // pred_check_branch
      %37 = sbr.rel (0) target = $region13
    $region12: #{tpu_custom_call.1} parent=1 // pred_region
      %s39 = ssub.s32 128, 128
      %40 = vsyncadd [#allocation6], %s39
      %s42 = sshll.u32 [#allocation7], 4
      %s43 = int_to_ptr.vmem [resolvable:$true] %s42
      %45 = dma.hbm_to_vmem [thread:$0]  %s2, 128, %s43, [#allocation6]
    $region13: #{tpu_custom_call.1} parent=1 // pred_fallthru
      _
    // Predicated region
    $region14: #{tpu_custom_call.1} parent=1 // pred_check
      _
    $region15: #{tpu_custom_call.1} parent=1 // pred_check_branch
      %47 = sbr.rel (0) target = $region17
    $region16: #{tpu_custom_call.1} parent=1 // pred_region
      _
    $region17: #{tpu_custom_call.1} parent=1 // pred_fallthru
      _
    // Predicated region
    $region18: #{tpu_custom_call.1} parent=1 // pred_check
      _
    $region19: #{tpu_custom_call.1} parent=1 // pred_check_branch
      %49 = sbr.rel (0) target = $region21
    $region20: #{tpu_custom_call.1} parent=1 // pred_region
      %s51 = ssub.s32 512, 512
      %52 = vsyncadd [#allocation9], %s51
      %s53 = sshll.u32 [#allocation8], 4
      %s54 = int_to_ptr.vmem [resolvable:$true] %s53
      %59 = dma.hbm_to_vmem [thread:$0]  %s4, 512, %s54, [#allocation9], 128, 128, 8
    $region21: #{tpu_custom_call.1} parent=1 // pred_fallthru
      _
    // Predicated region
    $region22: #{tpu_custom_call.1} parent=1 // pred_check
      _
    $region23: #{tpu_custom_call.1} parent=1 // pred_check_branch
      %61 = sbr.rel (0) target = $region25
    $region24: #{tpu_custom_call.1} parent=1 // pred_region
      _
    $region25: #{tpu_custom_call.1} parent=1 // pred_fallthru
      _
    // Predicated region
    $region26: #{tpu_custom_call.1} parent=1 // pred_check
      _
    $region27: #{tpu_custom_call.1} parent=1 // pred_check_branch
      %63 = sbr.rel (0) target = $region29
    $region28: #{tpu_custom_call.1} parent=1 // pred_region
      _
    $region29: #{tpu_custom_call.1} parent=1 // pred_fallthru
      _
    // Predicated region
    $region30: #{tpu_custom_call.1} parent=1 // pred_check
      _
    $region31: #{tpu_custom_call.1} parent=1 // pred_check_branch
      %65 = sbr.rel (0) target = $region33
    $region32: #{tpu_custom_call.1} parent=1 // pred_region
      %66 = dma.done [#allocation3], 32
    $region33: #{tpu_custom_call.1} parent=1 // pred_fallthru
      _
    // Predicated region
    $region34: #{tpu_custom_call.1} parent=1 // pred_check
      _
    $region35: #{tpu_custom_call.1} parent=1 // pred_check_branch
      %68 = sbr.rel (0) target = $region37
    $region36: #{tpu_custom_call.1} parent=1 // pred_region
      %69 = dma.done [#allocation6], 32
    $region37: #{tpu_custom_call.1} parent=1 // pred_fallthru
      _
    // Predicated region
    $region38: #{tpu_custom_call.1} parent=1 // pred_check
      _
    $region39: #{tpu_custom_call.1} parent=1 // pred_check_branch
      %71 = sbr.rel (0) target = $region41
    $region40: #{tpu_custom_call.1} parent=1 // pred_region
      %72 = dma.done [#allocation6], 128
    $region41: #{tpu_custom_call.1} parent=1 // pred_fallthru
      _
    // Predicated region
    $region42: #{tpu_custom_call.1} parent=1 // pred_check
      _
    $region43: #{tpu_custom_call.1} parent=1 // pred_check_branch
      %74 = sbr.rel (0) target = $region45
    $region44: #{tpu_custom_call.1} parent=1 // pred_region
      %75 = dma.done [#allocation9], 512
    $region45: #{tpu_custom_call.1} parent=1 // pred_fallthru
      _
    %v76 = vld [vmem:[#allocation2] sm:$0x3]
    %v77 = vld [vmem:[#allocation5] sm:$0x3]
    %v78 = vld [vmem:[#allocation7] sm:$0xff]
    %v79 = vld [vmem:[%s3] sm:$0xf]
    %vm80 = vcmask 31744
    %v82 = vsel %vm80, %v77, 0
    %vm84 = vcmask 1043456
    %v86 = vsel %vm84, %v79, 0
    %88 = vmatprep.subr.mxu0 0.0
    %89 = vmatpush1.msra.mxu0 0.0
    %90 = vmatprep.subr.mxu0 0.0
    %91 = vmatpush1.msra.mxu0 0.0
    %92 = vmatprep.subr.mxu0 0.0
    %93 = vmatpush1.msra.mxu0 0.0
    %94 = vmatprep.subr.mxu0 0.0
    %95 = vmatpush1.msra.mxu0 0.0
    %96 = vmatprep.subr.mxu0 0.0
    %97 = vmatpush1.msra.mxu0 0.0
    %98 = vmatprep.subr.mxu0 0.0
    %99 = vmatpush1.msra.mxu0 0.0
    %100 = vmatprep.subr.mxu0 0.0
    %101 = vmatpush1.msra.mxu0 0.0
    %102 = vmatprep.subr.mxu0 0.0
    %103 = vmatpush1.msra.mxu0 0.0
    %104 = vmatprep.subr.mxu0 0.0
    %105 = vmatpush1.msra.mxu0 0.0
    %106 = vmatprep.subr.mxu0 0.0
    %107 = vmatpush1.msra.mxu0 0.0
    %108 = vmatprep.subr.mxu0 0.0
    %109 = vmatpush1.msra.mxu0 0.0
    %110 = vmatprep.subr.mxu0 0.0
    %111 = vmatpush1.msra.mxu0 0.0
    %112 = vmatprep.subr.mxu0 0.0
    %113 = vmatpush1.msra.mxu0 0.0
    %114 = vmatprep.subr.mxu0 0.0
    %115 = vmatpush1.msra.mxu0 0.0
    %116 = vmatprep.subr.mxu0 0.0
    %117 = vmatpush1.msra.mxu0 0.0
    %118 = vmatprep.subr.mxu0 0.0
    %119 = vmatpush1.msra.mxu0 %v86
    %120 = vmatprep.subr.mxu0 0.0
    %121 = vmatpush2.msra.mxu0 0.0
    %122 = vmatprep.subr.mxu0 0.0
    %123 = vmatpush2.msra.mxu0 0.0
    %124 = vmatprep.subr.mxu0 0.0
    %125 = vmatpush2.msra.mxu0 0.0
    %126 = vmatprep.subr.mxu0 0.0
    %127 = vmatpush2.msra.mxu0 0.0
    %128 = vmatprep.subr.mxu0 0.0
    %129 = vmatpush2.msra.mxu0 0.0
    %130 = vmatprep.subr.mxu0 0.0
    %131 = vmatpush2.msra.mxu0 0.0
    %132 = vmatprep.subr.mxu0 0.0
    %133 = vmatpush2.msra.mxu0 0.0
    %134 = vmatprep.subr.mxu0 0.0
    %135 = vmatpush2.msra.mxu0 0.0
    %136 = vmatprep.subr.mxu0 0.0
    %137 = vmatpush2.msra.mxu0 0.0
    %138 = vmatprep.subr.mxu0 0.0
    %139 = vmatpush2.msra.mxu0 0.0
    %140 = vmatprep.subr.mxu0 0.0
    %141 = vmatpush2.msra.mxu0 0.0
    %142 = vmatprep.subr.mxu0 0.0
    %143 = vmatpush2.msra.mxu0 0.0
    %144 = vmatprep.subr.mxu0 0.0
    %145 = vmatpush2.msra.mxu0 0.0
    %146 = vmatprep.subr.mxu0 0.0
    %147 = vmatpush2.msra.mxu0 0.0
    %148 = vmatprep.subr.mxu0 0.0
    %149 = vmatpush2.msra.mxu0 0.0
    %150 = vmatprep.subr.mxu0 0.0
    %151 = vmatpush2.msra.mxu0 0.0
    %152 = vmatprep.mubr.f32.mxu0 0.0
    %153 = vmatmul.mubr.f32.gmra.mxu0 %v82
    %v154 = vpop.f32.mrf.mxu0
    %v155 = vadd.f32 0.0, %v154
    %v156 = vpop.f32.mrf.mxu0
    %157 = vdwg.mxu0
    %vm158 = vcmask 64512
    %v160 = vsel %vm158, %v76, 0
    %162 = vmatprep.subr.mxu0 0.0
    %163 = vmatpush1.msra.mxu0 0.0
    %164 = vmatprep.subr.mxu0 0.0
    %165 = vmatpush1.msra.mxu0 0.0
    %166 = vmatprep.subr.mxu0 0.0
    %167 = vmatpush1.msra.mxu0 0.0
    %168 = vmatprep.subr.mxu0 0.0
    %169 = vmatpush1.msra.mxu0 0.0
    %170 = vmatprep.subr.mxu0 0.0
    %171 = vmatpush1.msra.mxu0 0.0
    %172 = vmatprep.subr.mxu0 0.0
    %173 = vmatpush1.msra.mxu0 0.0
    %174 = vmatprep.subr.mxu0 0.0
    %175 = vmatpush1.msra.mxu0 0.0
    %176 = vmatprep.subr.mxu0 0.0
    %177 = vmatpush1.msra.mxu0 0.0
    %178 = vmatprep.subr.mxu0 0.0
    %179 = vmatpush1.msra.mxu0 0.0
    %180 = vmatprep.subr.mxu0 0.0
    %181 = vmatpush1.msra.mxu0 0.0
    %182 = vmatprep.subr.mxu0 0.0
    %183 = vmatpush1.msra.mxu0 0.0
    %184 = vmatprep.subr.mxu0 0.0
    %185 = vmatpush1.msra.mxu0 0.0
    %186 = vmatprep.subr.mxu0 0.0
    %187 = vmatpush1.msra.mxu0 0.0
    %188 = vmatprep.subr.mxu0 0.0
    %189 = vmatpush1.msra.mxu0 0.0
    %190 = vmatprep.subr.mxu0 0.0
    %191 = vmatpush1.msra.mxu0 0.0
    %192 = vmatprep.subr.mxu0 0.0
    %193 = vmatpush1.msra.mxu0 %v78
    %194 = vmatprep.subr.mxu0 0.0
    %195 = vmatpush2.msra.mxu0 0.0
    %196 = vmatprep.subr.mxu0 0.0
    %197 = vmatpush2.msra.mxu0 0.0
    %198 = vmatprep.subr.mxu0 0.0
    %199 = vmatpush2.msra.mxu0 0.0
    %200 = vmatprep.subr.mxu0 0.0
    %201 = vmatpush2.msra.mxu0 0.0
    %202 = vmatprep.subr.mxu0 0.0
    %203 = vmatpush2.msra.mxu0 0.0
    %204 = vmatprep.subr.mxu0 0.0
    %205 = vmatpush2.msra.mxu0 0.0
    %206 = vmatprep.subr.mxu0 0.0
    %207 = vmatpush2.msra.mxu0 0.0
    %208 = vmatprep.subr.mxu0 0.0
    %209 = vmatpush2.msra.mxu0 0.0
    %210 = vmatprep.subr.mxu0 0.0
    %211 = vmatpush2.msra.mxu0 0.0
    %212 = vmatprep.subr.mxu0 0.0
    %213 = vmatpush2.msra.mxu0 0.0
    %214 = vmatprep.subr.mxu0 0.0
    %215 = vmatpush2.msra.mxu0 0.0
    %216 = vmatprep.subr.mxu0 0.0
    %217 = vmatpush2.msra.mxu0 0.0
    %218 = vmatprep.subr.mxu0 0.0
    %219 = vmatpush2.msra.mxu0 0.0
    %220 = vmatprep.subr.mxu0 0.0
    %221 = vmatpush2.msra.mxu0 0.0
    %222 = vmatprep.subr.mxu0 0.0
    %223 = vmatpush2.msra.mxu0 0.0
    %224 = vmatprep.subr.mxu0 0.0
    %225 = vmatpush2.msra.mxu0 0.0
    %226 = vmatprep.mubr.f32.mxu0 0.0
    %227 = vmatmul.mubr.f32.gmra.mxu0 %v160
    %v228 = vpop.f32.mrf.mxu0
    %v229 = vadd.f32 %v155, %v228
    %v230 = vpop.f32.mrf.mxu0
    %231 = vdwg.mxu0
    %v232 = vld [vmem:[%s6] sm:$0x1]
    %v233 = vlaneseq
    %v234 = vshrl.u32 %v233, 7
    %v235 = vsub.s32 0, %v234
    %v236 = vrot.slane %v232, %v235
    %v237 = vadd.f32 %v229, %v236
    %vm238 = vcmp.gt.f32.partialorder %v237, 0.0
    %v239 = vmul.f32 %v237, 0.01
    %v240 = vsel %vm238, %v237, %v239
    %v241 = vld [vmem:[#allocation8] sm:$0xff]
    %v242 = vld [vmem:[#allocation8 + $0x8] sm:$0xff]
    %v243 = vld [vmem:[#allocation8 + $0x10] sm:$0xff]
    %v244 = vld [vmem:[#allocation8 + $0x18] sm:$0xff]
    %v245 = vld [vmem:[%s6 + $0x1] sm:$0x1]
    %v246 = vlaneseq
    %v247 = vshrl.u32 %v246, 7
    %v248 = vsub.s32 0, %v247
    %v249 = vrot.slane %v245, %v248
    %vm250 = vcmask 261120
    %v252 = vsel %vm250, %v240, 0
    %254 = vmatprep.subr.mxu0 0.0
    %255 = vmatpush1.msra.mxu0 0.0
    %256 = vmatprep.subr.mxu0 0.0
    %257 = vmatpush1.msra.mxu0 0.0
    %258 = vmatprep.subr.mxu0 0.0
    %259 = vmatpush1.msra.mxu0 0.0
    %260 = vmatprep.subr.mxu0 0.0
    %261 = vmatpush1.msra.mxu0 0.0
    %262 = vmatprep.subr.mxu0 0.0
    %263 = vmatpush1.msra.mxu0 0.0
    %264 = vmatprep.subr.mxu0 0.0
    %265 = vmatpush1.msra.mxu0 0.0
    %266 = vmatprep.subr.mxu0 0.0
    %267 = vmatpush1.msra.mxu0 0.0
    %268 = vmatprep.subr.mxu0 0.0
    %269 = vmatpush1.msra.mxu0 0.0
    %270 = vmatprep.subr.mxu0 0.0
    %271 = vmatpush1.msra.mxu0 0.0
    %272 = vmatprep.subr.mxu0 0.0
    %273 = vmatpush1.msra.mxu0 0.0
    %274 = vmatprep.subr.mxu0 0.0
    %275 = vmatpush1.msra.mxu0 0.0
    %276 = vmatprep.subr.mxu0 0.0
    %277 = vmatpush1.msra.mxu0 0.0
    %278 = vmatprep.subr.mxu0 0.0
    %279 = vmatpush1.msra.mxu0 %v244
    %280 = vmatprep.subr.mxu0 0.0
    %281 = vmatpush1.msra.mxu0 %v243
    %282 = vmatprep.subr.mxu0 0.0
    %283 = vmatpush1.msra.mxu0 %v242
    %284 = vmatprep.subr.mxu0 0.0
    %285 = vmatpush1.msra.mxu0 %v241
    %286 = vmatprep.subr.mxu0 0.0
    %287 = vmatpush2.msra.mxu0 0.0
    %288 = vmatprep.subr.mxu0 0.0
    %289 = vmatpush2.msra.mxu0 0.0
    %290 = vmatprep.subr.mxu0 0.0
    %291 = vmatpush2.msra.mxu0 0.0
    %292 = vmatprep.subr.mxu0 0.0
    %293 = vmatpush2.msra.mxu0 0.0
    %294 = vmatprep.subr.mxu0 0.0
    %295 = vmatpush2.msra.mxu0 0.0
    %296 = vmatprep.subr.mxu0 0.0
    %297 = vmatpush2.msra.mxu0 0.0
    %298 = vmatprep.subr.mxu0 0.0
    %299 = vmatpush2.msra.mxu0 0.0
    %300 = vmatprep.subr.mxu0 0.0
    %301 = vmatpush2.msra.mxu0 0.0
    %302 = vmatprep.subr.mxu0 0.0
    %303 = vmatpush2.msra.mxu0 0.0
    %304 = vmatprep.subr.mxu0 0.0
    %305 = vmatpush2.msra.mxu0 0.0
    %306 = vmatprep.subr.mxu0 0.0
    %307 = vmatpush2.msra.mxu0 0.0
    %308 = vmatprep.subr.mxu0 0.0
    %309 = vmatpush2.msra.mxu0 0.0
    %310 = vmatprep.subr.mxu0 0.0
    %311 = vmatpush2.msra.mxu0 0.0
    %312 = vmatprep.subr.mxu0 0.0
    %313 = vmatpush2.msra.mxu0 0.0
    %314 = vmatprep.subr.mxu0 0.0
    %315 = vmatpush2.msra.mxu0 0.0
    %316 = vmatprep.subr.mxu0 0.0
    %317 = vmatpush2.msra.mxu0 0.0
    %318 = vmatprep.mubr.f32.mxu0 0.0
    %319 = vmatmul.mubr.f32.gmra.mxu0 %v252
    %v320 = vpop.f32.mrf.mxu0
    %v321 = vadd.f32 %v249, %v320
    %v322 = vpop.f32.mrf.mxu0
    %323 = vdwg.mxu0
    %vm324 = vcmp.gt.f32.partialorder %v321, 0.0
    %v325 = vmul.f32 %v321, 0.01
    %v326 = vsel %vm324, %v321, %v325
    %v327 = vld [vmem:[%s5] sm:$0x1]
    %v328 = vld [vmem:[%s6 + $0x2] sm:$0x1]
    %330 = vset.pattern.permute.xlu0 0
    %331 = vperm.xlu0 %330, %v328
    %v332 = vpop.permute.xlu0 %331
    %v335 = vsel %vm250, %v327, 0
    %v338 = vsel %vm250, %v326, 0
    %340 = vmatprep.subr.mxu0 0.0
    %341 = vmatpush1.xpose.msra.mxu0 0.0
    %342 = vmatprep.subr.mxu0 0.0
    %343 = vmatpush1.xpose.msra.mxu0 0.0
    %344 = vmatprep.subr.mxu0 0.0
    %345 = vmatpush1.xpose.msra.mxu0 0.0
    %346 = vmatprep.subr.mxu0 0.0
    %347 = vmatpush1.xpose.msra.mxu0 0.0
    %348 = vmatprep.subr.mxu0 0.0
    %349 = vmatpush1.xpose.msra.mxu0 0.0
    %350 = vmatprep.subr.mxu0 0.0
    %351 = vmatpush1.xpose.msra.mxu0 0.0
    %352 = vmatprep.subr.mxu0 0.0
    %353 = vmatpush1.xpose.msra.mxu0 0.0
    %354 = vmatprep.subr.mxu0 0.0
    %355 = vmatpush1.xpose.msra.mxu0 0.0
    %356 = vmatprep.subr.mxu0 0.0
    %357 = vmatpush1.xpose.msra.mxu0 0.0
    %358 = vmatprep.subr.mxu0 0.0
    %359 = vmatpush1.xpose.msra.mxu0 0.0
    %360 = vmatprep.subr.mxu0 0.0
    %361 = vmatpush1.xpose.msra.mxu0 0.0
    %362 = vmatprep.subr.mxu0 0.0
    %363 = vmatpush1.xpose.msra.mxu0 0.0
    %364 = vmatprep.subr.mxu0 0.0
    %365 = vmatpush1.xpose.msra.mxu0 0.0
    %366 = vmatprep.subr.mxu0 0.0
    %367 = vmatpush1.xpose.msra.mxu0 0.0
    %368 = vmatprep.subr.mxu0 0.0
    %369 = vmatpush1.xpose.msra.mxu0 0.0
    %370 = vmatprep.subr.mxu0 0.0
    %371 = vmatpush1.xpose.msra.mxu0 %v338
    %372 = vmatprep.subr.mxu0 0.0
    %373 = vmatpush2.xpose.msra.mxu0 0.0
    %374 = vmatprep.subr.mxu0 0.0
    %375 = vmatpush2.xpose.msra.mxu0 0.0
    %376 = vmatprep.subr.mxu0 0.0
    %377 = vmatpush2.xpose.msra.mxu0 0.0
    %378 = vmatprep.subr.mxu0 0.0
    %379 = vmatpush2.xpose.msra.mxu0 0.0
    %380 = vmatprep.subr.mxu0 0.0
    %381 = vmatpush2.xpose.msra.mxu0 0.0
    %382 = vmatprep.subr.mxu0 0.0
    %383 = vmatpush2.xpose.msra.mxu0 0.0
    %384 = vmatprep.subr.mxu0 0.0
    %385 = vmatpush2.xpose.msra.mxu0 0.0
    %386 = vmatprep.subr.mxu0 0.0
    %387 = vmatpush2.xpose.msra.mxu0 0.0
    %388 = vmatprep.subr.mxu0 0.0
    %389 = vmatpush2.xpose.msra.mxu0 0.0
    %390 = vmatprep.subr.mxu0 0.0
    %391 = vmatpush2.xpose.msra.mxu0 0.0
    %392 = vmatprep.subr.mxu0 0.0
    %393 = vmatpush2.xpose.msra.mxu0 0.0
    %394 = vmatprep.subr.mxu0 0.0
    %395 = vmatpush2.xpose.msra.mxu0 0.0
    %396 = vmatprep.subr.mxu0 0.0
    %397 = vmatpush2.xpose.msra.mxu0 0.0
    %398 = vmatprep.subr.mxu0 0.0
    %399 = vmatpush2.xpose.msra.mxu0 0.0
    %400 = vmatprep.subr.mxu0 0.0
    %401 = vmatpush2.xpose.msra.mxu0 0.0
    %402 = vmatprep.subr.mxu0 0.0
    %403 = vmatpush2.xpose.msra.mxu0 0.0
    %404 = vmatprep.mubr.f32.mxu0 0.0
    %405 = vmatmul.mubr.f32.gmra.mxu0 %v335
    %v406 = vpop.f32.mrf.mxu0
    %v407 = vadd.f32 %v332, %v406
    %v408 = vpop.f32.mrf.mxu0
    %409 = vdwg.mxu0
    %vm410 = vcmask 8192
    %411 = vst.msk [vmem:[#allocation10] sm:$0x1] %vm410, %v407
    // Predicated region
    $region46: #{tpu_custom_call.1} parent=1 // pred_check
      _
    $region47: #{tpu_custom_call.1} parent=1 // pred_check_branch
      %413 = sbr.rel (0) target = $region49
    $region48: #{tpu_custom_call.1} parent=1 // pred_region
      %s415 = ssub.s32 16, 16
      %416 = vsyncadd [#allocation4], %s415
      %s418 = sshll.u32 [#allocation10], 4
      %s419 = int_to_ptr.vmem [resolvable:$true] %s418
      %421 = dma.vmem_to_hbm [thread:$0]  %s419, 16, %s7, [#allocation4]
    $region49: #{tpu_custom_call.1} parent=1 // pred_fallthru
      _
    // Predicated region
    $region50: #{tpu_custom_call.1} parent=1 // pred_check
      _
    $region51: #{tpu_custom_call.1} parent=1 // pred_check_branch
      %423 = sbr.rel (0) target = $region53
    $region52: #{tpu_custom_call.1} parent=1 // pred_region
      %424 = dma.done [#allocation4], 16
    $region53: #{tpu_custom_call.1} parent=1 // pred_fallthru
      _
    %425 = vsyncpa [#allocation3], 1
    %426 = vsyncpa [#allocation6], 1
    %427 = vsyncpa [#allocation9], 1
    %428 = vsyncpa [#allocation4], 1

</llo_original>
